<compile_context>
chip_gen: v7x
topology: tpu7x:2x2x1
jax: 0.10.0
libtpu: 0.0.40
codegen_flags: <defaults>
</compile_context>

<pallas_src>
import functools

import jax
import jax.numpy as jnp
from jax.experimental import pallas as pl
from jax.experimental.pallas import tpu as pltpu

_NEG_INF = -1e30  # softmax mask value for padded feature lanes (f32-safe)


def _round_up(a, m):
    return ((a + m - 1) // m) * m


def _feature_attention_kernel(x_ref, w1_ref, b1_ref, aw2_ref, ab2_ref,
                              tw2_ref, tb2_ref, gamma_ref, beta_ref,
                              out_ref, *, f_pad, inv_f, pad_frac):
    x = x_ref[...].astype(jnp.bfloat16)                      # (bb, F_pad)

    # ---- fused first layer: [ transform | attention ] hidden, one MXU pass.
    y = jnp.dot(x, w1_ref[...], preferred_element_type=jnp.float32)
    y = jnp.maximum(y + b1_ref[...], 0.0)                    # (bb, F_pad+H_pad) f32
    t_h = y[:, :f_pad].astype(jnp.bfloat16)                  # transform hidden
    a_h = y[:, f_pad:].astype(jnp.bfloat16)                  # attention hidden

    # ---- attention branch: Linear(H, F) -> Softmax(-1)  (f32 statistics).
    logits = jnp.dot(a_h, aw2_ref[...],
                     preferred_element_type=jnp.float32) + ab2_ref[...]
    m = jnp.max(logits, axis=-1, keepdims=True)
    e = jnp.exp(logits - m)                                  # padded lanes -> exp(-1e30) = 0
    denom = jnp.sum(e, axis=-1, keepdims=True)
    weights = e * pl.reciprocal(denom, approx=True)          # EUP, not VALU divide

    # ---- transform branch: Linear(F, F) -> LayerNorm(F)  (f32 statistics).
    t = jnp.dot(t_h, tw2_ref[...],
                preferred_element_type=jnp.float32) + tb2_ref[...]
    # Padded lanes of t are exactly 0 (zero-padded tw2 columns / tb2), so:
    #   sum(t)        over F_pad lanes == sum over the real F lanes
    #   sum(centered^2) over F_pad    == sum over real F + (F_pad-F) * mu^2
    # -> correct the variance analytically instead of building an iota mask.
    mu = jnp.sum(t, axis=-1, keepdims=True) * inv_f
    centered = t - mu
    var = (jnp.sum(centered * centered, axis=-1, keepdims=True) * inv_f
           - pad_frac * mu * mu)                             # biased, as torch LayerNorm
    t_norm = centered * jax.lax.rsqrt(var + 1e-5) * gamma_ref[...] + beta_ref[...]

    out_ref[...] = (t_norm * weights).astype(out_ref.dtype)


def _pack_params(params, F, H, F_pad, H_pad):
    """Pad + pack weights.

    Implicit contract relied on by the kernel:
      * all padded lanes of w1/b1/tw2/tb2/gamma/beta/aw2 are exactly 0,
      * padded lanes of ab2 are -1e30 (so softmax gives them zero weight).
    """
    bf16, f32 = jnp.bfloat16, jnp.float32

    def pad2(w, rows, cols, value=0.0):
        return jnp.pad(w, ((0, rows - w.shape[0]), (0, cols - w.shape[1])),
                       constant_values=value)

    def pad1(v, n, value=0.0):
        return jnp.pad(v, (0, n - v.shape[0]), constant_values=value)

    # Fused first layer: [ tw1 | aw1 ] -> (F_pad, F_pad + H_pad), bias likewise.
    w1 = jnp.concatenate([pad2(params["tw1"], F_pad, F_pad),
                          pad2(params["aw1"], F_pad, H_pad)], axis=1).astype(bf16)
    b1 = jnp.concatenate([pad1(params["tb1"], F_pad),
                          pad1(params["ab1"], H_pad)]).reshape(1, -1).astype(f32)

    aw2 = pad2(params["aw2"], H_pad, F_pad).astype(bf16)
    ab2 = pad1(params["ab2"], F_pad, _NEG_INF).reshape(1, -1).astype(f32)

    tw2 = pad2(params["tw2"], F_pad, F_pad).astype(bf16)
    tb2 = pad1(params["tb2"], F_pad).reshape(1, -1).astype(f32)
    gamma = pad1(params["gamma"], F_pad).reshape(1, -1).astype(f32)
    beta = pad1(params["beta"], F_pad).reshape(1, -1).astype(f32)

    return (w1, b1, aw2, ab2, tw2, tb2, gamma, beta)


def feature_attention(x, params, *, block_b=None):
    """x: (B, F). params: dict of weights (see init_params). Returns (B, F) in x.dtype."""
    B, F = x.shape
    H = params["aw1"].shape[1]
    F_pad = _round_up(max(F, 128), 128)
    H_pad = _round_up(max(H, 128), 128)

    # ---- generation-aware VMEM budget (never set the limit to physical VMEM).
    try:
        vmem_cap = int(pltpu.get_tpu_info().vmem_capacity_bytes)
    except Exception:
        vmem_cap = 64 * 2**20            # conservative default (v7x per-core)
    budget = int(vmem_cap * 0.8)         # ~102 MiB v5e/v6e, ~51 MiB v7x
    two_tc_like = vmem_cap <= 96 * 2**20  # proxy: only v7x has 64 MiB/TC (and 2 TCs)

    # ---- weight footprint: single-buffered (whole-array VMEM, not pipelined).
    w_elems = F_pad * (F_pad + H_pad) + H_pad * F_pad + F_pad * F_pad
    weight_bytes = w_elems * 2 + (H_pad + 6 * F_pad) * 4

    def tile_bytes(bb):
        # double-buffered x tile (<= f32) + double-buffered bf16 out tile
        # + rough f32 transient slab (y / logits / t) per live tile.
        return bb * F_pad * (2 * 4 + 2 * 2) + bb * (F_pad + H_pad) * 4 * 2

    # ---- batch tiling: large, 16-row-aligned tiles (bf16 sublane packing).
    if block_b is None:
        target = 1024 if F_pad <= 512 else (512 if F_pad <= 1024 else 256)
        block_b = min(target, _round_up(B, 16))
        # Give v7x's second TensorCore work only if the split keeps >=256 rows.
        if two_tc_like and B >= 512 and pl.cdiv(B, block_b) < 2:
            block_b = max(256, _round_up(pl.cdiv(B, 2), 16))
    block_b = max(16, _round_up(block_b, 16))

    # Shrink block_b only against the *tile* budget — resident weight bytes are
    # independent of block_b and must never collapse the batch tile.
    tile_budget = max(budget - weight_bytes - (4 << 20), 8 << 20)
    while tile_bytes(block_b) > tile_budget and block_b > 16:
        block_b = max(16, _round_up(block_b // 2, 16))

    B_pad = _round_up(B, block_b)
    grid = (B_pad // block_b,)

    packed = _pack_params(params, F, H, F_pad, H_pad)

    # Avoid the wrapper-side pad/cast pass over x when no padding is needed:
    # stream x as-is and cast to bf16 inside the kernel.
    if B_pad != B or F_pad != F:
        x_in = jnp.pad(x.astype(jnp.bfloat16), ((0, B_pad - B), (0, F_pad - F)))
    else:
        x_in = x

    flops = (2 * B_pad * F_pad * (F_pad + H_pad)      # fused first layer
             + 2 * B_pad * H_pad * F_pad              # attention Linear2
             + 2 * B_pad * F_pad * F_pad              # transform Linear2
             + 12 * B_pad * F_pad)                    # softmax / LayerNorm / product
    cost = pl.CostEstimate(
        flops=int(flops),
        transcendentals=int(B_pad * F_pad + 2 * B_pad),
        bytes_accessed=int(B_pad * F_pad * (x_in.dtype.itemsize + 2)
                           + w_elems * 2 + 8 * F_pad * 4),
    )
    vmem_limit = int(min(budget,
                         max(weight_bytes + tile_bytes(block_b) + (6 << 20),
                             32 * 2**20)))

    kernel = functools.partial(_feature_attention_kernel,
                               f_pad=F_pad,
                               inv_f=float(1.0 / F),
                               pad_frac=float((F_pad - F) / F))

    # Weights: whole array resident in VMEM, single buffer, copied once
    # (not part of the double-buffered pipeline).
    weight_spec = pl.BlockSpec(memory_space=pltpu.MemorySpace.VMEM)

    grid_spec = pltpu.PrefetchScalarGridSpec(
        num_scalar_prefetch=0,
        grid=grid,
        in_specs=[
            pl.BlockSpec((block_b, F_pad), lambda i: (i, 0)),  # x tile (pipelined)
            weight_spec,   # fused W1 [tw1|aw1]
            weight_spec,   # fused b1
            weight_spec,   # attention W2
            weight_spec,   # attention b2 (-1e30 pad)
            weight_spec,   # transform W2
            weight_spec,   # transform b2
            weight_spec,   # LayerNorm gamma
            weight_spec,   # LayerNorm beta
        ],
        out_specs=pl.BlockSpec((block_b, F_pad), lambda i: (i, 0)),
    )

    out_p = pl.pallas_call(
        kernel,
        out_shape=jax.ShapeDtypeStruct((B_pad, F_pad), jnp.bfloat16),
        grid_spec=grid_spec,
        compiler_params=pltpu.CompilerParams(
            dimension_semantics=("parallel",),
            vmem_limit_bytes=vmem_limit),
        cost_estimate=cost,
    )(x_in, *packed)

    return out_p[:B, :F].astype(x.dtype)


def init_params(key, feature_dim, hidden=32):
    ks = jax.random.split(key, 8)
    s = 0.1
    return {
        "aw1": s * jax.random.normal(ks[0], (feature_dim, hidden), jnp.float32),
        "ab1": s * jax.random.normal(ks[1], (hidden,), jnp.float32),
        "aw2": s * jax.random.normal(ks[2], (hidden, feature_dim), jnp.float32),
        "ab2": s * jax.random.normal(ks[3], (feature_dim,), jnp.float32),
        "tw1": s * jax.random.normal(ks[4], (feature_dim, feature_dim), jnp.float32),
        "tb1": s * jax.random.normal(ks[5], (feature_dim,), jnp.float32),
        "tw2": s * jax.random.normal(ks[6], (feature_dim, feature_dim), jnp.float32),
        "tb2": s * jax.random.normal(ks[7], (feature_dim,), jnp.float32),
        "gamma": jnp.ones((feature_dim,), jnp.float32),
        "beta": jnp.zeros((feature_dim,), jnp.float32),
    }


def _reference(x, p):
    h = jnp.maximum(x @ p["aw1"] + p["ab1"], 0.0)
    w = jax.nn.softmax(h @ p["aw2"] + p["ab2"], axis=-1)
    t = jnp.maximum(x @ p["tw1"] + p["tb1"], 0.0)
    t = t @ p["tw2"] + p["tb2"]
    mu = jnp.mean(t, axis=-1, keepdims=True)
    var = jnp.mean((t - mu) ** 2, axis=-1, keepdims=True)
    t = (t - mu) / jnp.sqrt(var + 1e-5) * p["gamma"] + p["beta"]
    return t * w


if __name__ == "__main__":
    B, F = 8, 16
    key = jax.random.PRNGKey(0)
    kx, kp = jax.random.split(key)
    x = jax.random.normal(kx, (B, F), jnp.float32)
    params = init_params(kp, F)

    out = jax.block_until_ready(feature_attention(x, params))
    ref = _reference(x, params)

    assert out.shape == (B, F) and out.dtype == x.dtype
    max_err = float(jnp.max(jnp.abs(out - ref)))
    # bf16 MXU operands + bf16 output store + approx reciprocal -> loose f32 tolerance.
    assert jnp.allclose(out, ref, atol=4e-2, rtol=4e-2), max_err
    print("KERNEL_OK")
</pallas_src>

<mosaic_0001>
module attributes {stable_mosaic.version = 11 : i64} {
  func.func @_feature_attention_kernel(%arg0: i32, %arg1: memref<16x128xbf16, #tpu.memory_space<vmem>>, %arg2: memref<128x256xbf16, #tpu.memory_space<vmem>>, %arg3: memref<1x256xf32, #tpu.memory_space<vmem>>, %arg4: memref<128x128xbf16, #tpu.memory_space<vmem>>, %arg5: memref<1x128xf32, #tpu.memory_space<vmem>>, %arg6: memref<128x128xbf16, #tpu.memory_space<vmem>>, %arg7: memref<1x128xf32, #tpu.memory_space<vmem>>, %arg8: memref<1x128xf32, #tpu.memory_space<vmem>>, %arg9: memref<1x128xf32, #tpu.memory_space<vmem>>, %arg10: memref<16x128xbf16, #tpu.memory_space<vmem>>) attributes {dimension_semantics = [#tpu.dimension_semantics<parallel>], iteration_bounds = array<i64: 1>, scalar_prefetch = 0 : i64, scratch_operands = 0 : i64, tpu.core_type = #tpu.core_type<tc>, window_params = [{transform_indices = @transform_0, window_bounds = array<i64: 16, 128>}, {pipeline_mode = #tpu.pipeline_mode<synchronous>, transform_indices = @transform_1, window_bounds = array<i64: 128, 256>}, {pipeline_mode = #tpu.pipeline_mode<synchronous>, transform_indices = @transform_2, window_bounds = array<i64: 1, 256>}, {pipeline_mode = #tpu.pipeline_mode<synchronous>, transform_indices = @transform_3, window_bounds = array<i64: 128, 128>}, {pipeline_mode = #tpu.pipeline_mode<synchronous>, transform_indices = @transform_4, window_bounds = array<i64: 1, 128>}, {pipeline_mode = #tpu.pipeline_mode<synchronous>, transform_indices = @transform_5, window_bounds = array<i64: 128, 128>}, {pipeline_mode = #tpu.pipeline_mode<synchronous>, transform_indices = @transform_6, window_bounds = array<i64: 1, 128>}, {pipeline_mode = #tpu.pipeline_mode<synchronous>, transform_indices = @transform_7, window_bounds = array<i64: 1, 128>}, {pipeline_mode = #tpu.pipeline_mode<synchronous>, transform_indices = @transform_8, window_bounds = array<i64: 1, 128>}, {transform_indices = @transform_9, window_bounds = array<i64: 16, 128>}]} {
    %c0 = arith.constant 0 : index
    %c0_0 = arith.constant 0 : index
    %0 = vector.load %arg1[%c0, %c0_0] : memref<16x128xbf16, #tpu.memory_space<vmem>>, vector<16x128xbf16>
    %c0_1 = arith.constant 0 : index
    %c0_2 = arith.constant 0 : index
    %1 = vector.load %arg2[%c0_1, %c0_2] : memref<128x256xbf16, #tpu.memory_space<vmem>>, vector<128x256xbf16>
    %cst = arith.constant dense<0.000000e+00> : vector<16x256xf32>
    %2 = tpu.matmul %0, %1, %cst {dimension_numbers = #tpu.dot_dimension_numbers<[1], [0], [0], [1], [0, 0, 1, 1], [], []>} : vector<16x128xbf16>, vector<128x256xbf16>, vector<16x256xf32> -> vector<16x256xf32>
    %c0_3 = arith.constant 0 : index
    %c0_4 = arith.constant 0 : index
    %3 = vector.load %arg3[%c0_3, %c0_4] : memref<1x256xf32, #tpu.memory_space<vmem>>, vector<1x256xf32>
    %4 = vector.broadcast %3 : vector<1x256xf32> to vector<16x256xf32>
    %5 = arith.addf %2, %4 : vector<16x256xf32>
    %cst_5 = arith.constant 0.000000e+00 : f32
    %6 = vector.broadcast %cst_5 : f32 to vector<16x256xf32>
    %7 = arith.maximumf %5, %6 : vector<16x256xf32>
    %8 = vector.extract_strided_slice %7 {offsets = [0, 0], sizes = [16, 128], strides = [1, 1]} : vector<16x256xf32> to vector<16x128xf32>
    %9 = arith.truncf %8 : vector<16x128xf32> to vector<16x128xbf16>
    %10 = vector.extract_strided_slice %7 {offsets = [0, 128], sizes = [16, 128], strides = [1, 1]} : vector<16x256xf32> to vector<16x128xf32>
    %11 = arith.truncf %10 : vector<16x128xf32> to vector<16x128xbf16>
    %c0_6 = arith.constant 0 : index
    %c0_7 = arith.constant 0 : index
    %12 = vector.load %arg4[%c0_6, %c0_7] : memref<128x128xbf16, #tpu.memory_space<vmem>>, vector<128x128xbf16>
    %cst_8 = arith.constant dense<0.000000e+00> : vector<16x128xf32>
    %13 = tpu.matmul %11, %12, %cst_8 {dimension_numbers = #tpu.dot_dimension_numbers<[1], [0], [0], [1], [0, 0, 1, 1], [], []>} : vector<16x128xbf16>, vector<128x128xbf16>, vector<16x128xf32> -> vector<16x128xf32>
    %c0_9 = arith.constant 0 : index
    %c0_10 = arith.constant 0 : index
    %14 = vector.load %arg5[%c0_9, %c0_10] : memref<1x128xf32, #tpu.memory_space<vmem>>, vector<1x128xf32>
    %15 = vector.broadcast %14 : vector<1x128xf32> to vector<16x128xf32>
    %16 = arith.addf %13, %15 : vector<16x128xf32>
    %cst_11 = arith.constant dense<0xFF800000> : vector<16xf32>
    %17 = vector.multi_reduction <maximumf>, %16, %cst_11 [1] : vector<16x128xf32> to vector<16xf32>
    %18 = vector.shape_cast %17 : vector<16xf32> to vector<16x1xf32>
    %19 = vector.broadcast %18 : vector<16x1xf32> to vector<16x128xf32>
    %20 = arith.subf %16, %19 : vector<16x128xf32>
    %21 = math.exp %20 : vector<16x128xf32>
    %cst_12 = arith.constant dense<0.000000e+00> : vector<16xf32>
    %22 = vector.multi_reduction <add>, %21, %cst_12 [1] : vector<16x128xf32> to vector<16xf32>
    %23 = vector.shape_cast %22 : vector<16xf32> to vector<16x1xf32>
    %24 = tpu.reciprocal %23 {approx = true} : vector<16x1xf32> -> vector<16x1xf32>
    %25 = vector.broadcast %24 : vector<16x1xf32> to vector<16x128xf32>
    %26 = arith.mulf %21, %25 : vector<16x128xf32>
    %c0_13 = arith.constant 0 : index
    %c0_14 = arith.constant 0 : index
    %27 = vector.load %arg6[%c0_13, %c0_14] : memref<128x128xbf16, #tpu.memory_space<vmem>>, vector<128x128xbf16>
    %cst_15 = arith.constant dense<0.000000e+00> : vector<16x128xf32>
    %28 = tpu.matmul %9, %27, %cst_15 {dimension_numbers = #tpu.dot_dimension_numbers<[1], [0], [0], [1], [0, 0, 1, 1], [], []>} : vector<16x128xbf16>, vector<128x128xbf16>, vector<16x128xf32> -> vector<16x128xf32>
    %c0_16 = arith.constant 0 : index
    %c0_17 = arith.constant 0 : index
    %29 = vector.load %arg7[%c0_16, %c0_17] : memref<1x128xf32, #tpu.memory_space<vmem>>, vector<1x128xf32>
    %30 = vector.broadcast %29 : vector<1x128xf32> to vector<16x128xf32>
    %31 = arith.addf %28, %30 : vector<16x128xf32>
    %cst_18 = arith.constant dense<0.000000e+00> : vector<16xf32>
    %32 = vector.multi_reduction <add>, %31, %cst_18 [1] : vector<16x128xf32> to vector<16xf32>
    %33 = vector.shape_cast %32 : vector<16xf32> to vector<16x1xf32>
    %cst_19 = arith.constant 6.250000e-02 : f32
    %34 = vector.broadcast %cst_19 : f32 to vector<16x1xf32>
    %35 = arith.mulf %33, %34 : vector<16x1xf32>
    %36 = vector.broadcast %35 : vector<16x1xf32> to vector<16x128xf32>
    %37 = arith.subf %31, %36 : vector<16x128xf32>
    %38 = arith.mulf %37, %37 : vector<16x128xf32>
    %cst_20 = arith.constant dense<0.000000e+00> : vector<16xf32>
    %39 = vector.multi_reduction <add>, %38, %cst_20 [1] : vector<16x128xf32> to vector<16xf32>
    %40 = vector.shape_cast %39 : vector<16xf32> to vector<16x1xf32>
    %cst_21 = arith.constant 6.250000e-02 : f32
    %41 = vector.broadcast %cst_21 : f32 to vector<16x1xf32>
    %42 = arith.mulf %40, %41 : vector<16x1xf32>
    %cst_22 = arith.constant 7.000000e+00 : f32
    %43 = vector.broadcast %cst_22 : f32 to vector<16x1xf32>
    %44 = arith.mulf %43, %35 : vector<16x1xf32>
    %45 = arith.mulf %44, %35 : vector<16x1xf32>
    %46 = arith.subf %42, %45 : vector<16x1xf32>
    %cst_23 = arith.constant 9.99999974E-6 : f32
    %47 = vector.broadcast %cst_23 : f32 to vector<16x1xf32>
    %48 = arith.addf %46, %47 : vector<16x1xf32>
    %49 = math.rsqrt %48 : vector<16x1xf32>
    %50 = vector.broadcast %49 : vector<16x1xf32> to vector<16x128xf32>
    %51 = arith.mulf %37, %50 : vector<16x128xf32>
    %c0_24 = arith.constant 0 : index
    %c0_25 = arith.constant 0 : index
    %52 = vector.load %arg8[%c0_24, %c0_25] : memref<1x128xf32, #tpu.memory_space<vmem>>, vector<1x128xf32>
    %53 = vector.broadcast %52 : vector<1x128xf32> to vector<16x128xf32>
    %54 = arith.mulf %51, %53 : vector<16x128xf32>
    %c0_26 = arith.constant 0 : index
    %c0_27 = arith.constant 0 : index
    %55 = vector.load %arg9[%c0_26, %c0_27] : memref<1x128xf32, #tpu.memory_space<vmem>>, vector<1x128xf32>
    %56 = vector.broadcast %55 : vector<1x128xf32> to vector<16x128xf32>
    %57 = arith.addf %54, %56 : vector<16x128xf32>
    %58 = arith.mulf %57, %26 : vector<16x128xf32>
    %59 = arith.truncf %58 : vector<16x128xf32> to vector<16x128xbf16>
    %c0_28 = arith.constant 0 : index
    %c0_29 = arith.constant 0 : index
    %60 = vector.load %arg10[%c0_28, %c0_29] : memref<16x128xbf16, #tpu.memory_space<vmem>>, vector<16x128xbf16>
    tpu.vector_store %arg10[%c0_28, %c0_29], %59 {strides = array<i32>} : memref<16x128xbf16, #tpu.memory_space<vmem>>, vector<16x128xbf16>,
    return
  }
  func.func @transform_0(%arg0: i32) -> (i32, i32) {
    %c0_i32 = arith.constant 0 : i32
    %c0_i32_0 = arith.constant 0 : i32
    return %arg0, %c0_i32 : i32, i32
  }
  func.func @transform_1(%arg0: i32) -> (i32, i32) {
    %c0_i32 = arith.constant 0 : i32
    %c0_i32_0 = arith.constant 0 : i32
    %c0_i32_1 = arith.constant 0 : i32
    return %c0_i32, %c0_i32_0 : i32, i32
  }
  func.func @transform_2(%arg0: i32) -> (i32, i32) {
    %c0_i32 = arith.constant 0 : i32
    %c0_i32_0 = arith.constant 0 : i32
    %c0_i32_1 = arith.constant 0 : i32
    return %c0_i32, %c0_i32_0 : i32, i32
  }
  func.func @transform_3(%arg0: i32) -> (i32, i32) {
    %c0_i32 = arith.constant 0 : i32
    %c0_i32_0 = arith.constant 0 : i32
    %c0_i32_1 = arith.constant 0 : i32
    return %c0_i32, %c0_i32_0 : i32, i32
  }
  func.func @transform_4(%arg0: i32) -> (i32, i32) {
    %c0_i32 = arith.constant 0 : i32
    %c0_i32_0 = arith.constant 0 : i32
    %c0_i32_1 = arith.constant 0 : i32
    return %c0_i32, %c0_i32_0 : i32, i32
  }
  func.func @transform_5(%arg0: i32) -> (i32, i32) {
    %c0_i32 = arith.constant 0 : i32
    %c0_i32_0 = arith.constant 0 : i32
    %c0_i32_1 = arith.constant 0 : i32
    return %c0_i32, %c0_i32_0 : i32, i32
  }
  func.func @transform_6(%arg0: i32) -> (i32, i32) {
    %c0_i32 = arith.constant 0 : i32
    %c0_i32_0 = arith.constant 0 : i32
    %c0_i32_1 = arith.constant 0 : i32
    return %c0_i32, %c0_i32_0 : i32, i32
  }
  func.func @transform_7(%arg0: i32) -> (i32, i32) {
    %c0_i32 = arith.constant 0 : i32
    %c0_i32_0 = arith.constant 0 : i32
    %c0_i32_1 = arith.constant 0 : i32
    return %c0_i32, %c0_i32_0 : i32, i32
  }
  func.func @transform_8(%arg0: i32) -> (i32, i32) {
    %c0_i32 = arith.constant 0 : i32
    %c0_i32_0 = arith.constant 0 : i32
    %c0_i32_1 = arith.constant 0 : i32
    return %c0_i32, %c0_i32_0 : i32, i32
  }
  func.func @transform_9(%arg0: i32) -> (i32, i32) {
    %c0_i32 = arith.constant 0 : i32
    %c0_i32_0 = arith.constant 0 : i32
    return %arg0, %c0_i32 : i32, i32
  }
}

</mosaic_0001>

<llo_original>
// kernel: tpu_custom_call.1
$region0: #{tpu_custom_call.1}
  #allocation0 [shape = 'u32[]', space=smem, size = 0x4, offset = 0x4, fixed_abs, tag = 'smem constant byte address 0x4 - core index']
  #allocation1 [shape = 'u32[144,128]{1,0:T(1,128)}', space=vmem, size = 0x12000, scoped, tag = 'internal scratch']
  %s0 = inlined_call_operand.hbm [shape: bf16[16,128], index: 0, kind: input, shape index: {}]
  %s1 = inlined_call_operand.hbm [shape: bf16[128,256], index: 1, kind: input, shape index: {}]
  %s2 = inlined_call_operand.vmem [shape: f32[1,256], index: 2, kind: input, shape index: {}]
  %s3 = inlined_call_operand.hbm [shape: bf16[128,128], index: 3, kind: input, shape index: {}]
  %s4 = inlined_call_operand.vmem [shape: f32[1,128], index: 4, kind: input, shape index: {}]
  %s5 = inlined_call_operand.hbm [shape: bf16[128,128], index: 5, kind: input, shape index: {}]
  %s6 = inlined_call_operand.vmem [shape: f32[1,128], index: 6, kind: input, shape index: {}]
  %s7 = inlined_call_operand.vmem [shape: f32[1,128], index: 7, kind: input, shape index: {}]
  %s8 = inlined_call_operand.vmem [shape: f32[1,128], index: 8, kind: input, shape index: {}]
  %s9 = inlined_call_operand.hbm [shape: bf16[16,128], index: 9, kind: output, shape index: {}]
  %s10 = sld [smem:[#allocation0]]
  $region62: #{tpu_custom_call.1} parent=0
    _
  %s12 = ssub.s32 1, %s10
  %s13 = scalar_select 0, %s12, %s10
  $region1: #{tpu_custom_call.1} parent=0
    #allocation2 [shape = 'u8[4096]{0}', space=vmem, size = 0x1000, scoped, tag = 'input window, operand 0, single buffered']
    #allocation3 [shape = 's32[1]{0}', space=sflag, size = 0x4, scoped, tag = 'scoped memory for tpu_custom_call.1']
    #allocation4 [shape = 's32[1]{0}', space=sflag, size = 0x4, scoped, tag = 'scoped memory for tpu_custom_call.1']
    #allocation5 [shape = 'u8[65536]{0}', space=vmem, size = 0x10000, scoped, tag = 'input window, operand 1, single buffered']
    #allocation6 [shape = 's32[1]{0}', space=sflag, size = 0x4, scoped, tag = 'scoped memory for tpu_custom_call.1']
    #allocation7 [shape = 'u8[32768]{0}', space=vmem, size = 0x8000, scoped, tag = 'input window, operand 3, single buffered']
    #allocation8 [shape = 'u8[32768]{0}', space=vmem, size = 0x8000, scoped, tag = 'input window, operand 5, single buffered']
    #allocation9 [shape = 's32[1]{0}', space=sflag, size = 0x4, scoped, tag = 'scoped memory for tpu_custom_call.1']
    #allocation10 [shape = 'u8[4096]{0}', space=vmem, size = 0x1000, scoped, tag = 'output window, operand 0, single buffered']
    %14 = vsyncpa [#allocation3], 0
    %15 = vsyncpa [#allocation6], 0
    %16 = vsyncpa [#allocation9], 0
    %17 = vsyncpa [#allocation4], 0
    // Predicated region
    $region2: #{tpu_custom_call.1} parent=1 // pred_check
      _
    $region3: #{tpu_custom_call.1} parent=1 // pred_check_branch
      %19 = sbr.rel (0) target = $region5
    $region4: #{tpu_custom_call.1} parent=1 // pred_region
      %s21 = ssub.s32 128, 128
      %22 = vsyncadd [#allocation3], %s21
      %s23 = sshll.u32 [#allocation2], 4
      %s24 = int_to_ptr.vmem [resolvable:$true] %s23
      %29 = dma.hbm_to_vmem [thread:$0]  %s0, 128, %s24, [#allocation3], 64, 64, 4
    $region5: #{tpu_custom_call.1} parent=1 // pred_fallthru
      _
    // Predicated region
    $region6: #{tpu_custom_call.1} parent=1 // pred_check
      _
    $region7: #{tpu_custom_call.1} parent=1 // pred_check_branch
      %31 = sbr.rel (0) target = $region9
    $region8: #{tpu_custom_call.1} parent=1 // pred_region
      %s33 = ssub.s32 2048, 2048
      %34 = vsyncadd [#allocation6], %s33
      %s35 = sshll.u32 [#allocation5], 4
      %s36 = int_to_ptr.vmem [resolvable:$true] %s35
      %41 = dma.hbm_to_vmem [thread:$0]  %s1, 2048, %s36, [#allocation6], 128, 128, 8
    $region9: #{tpu_custom_call.1} parent=1 // pred_fallthru
      _
    // Predicated region
    $region10: #{tpu_custom_call.1} parent=1 // pred_check
      _
    $region11: #{tpu_custom_call.1} parent=1 // pred_check_branch
      %43 = sbr.rel (0) target = $region13
    $region12: #{tpu_custom_call.1} parent=1 // pred_region
      _
    $region13: #{tpu_custom_call.1} parent=1 // pred_fallthru
      _
    // Predicated region
    $region14: #{tpu_custom_call.1} parent=1 // pred_check
      _
    $region15: #{tpu_custom_call.1} parent=1 // pred_check_branch
      %45 = sbr.rel (0) target = $region17
    $region16: #{tpu_custom_call.1} parent=1 // pred_region
      %s47 = ssub.s32 1024, 1024
      %48 = vsyncadd [#allocation6], %s47
      %s49 = sshll.u32 [#allocation7], 4
      %s50 = int_to_ptr.vmem [resolvable:$true] %s49
      %55 = dma.hbm_to_vmem [thread:$0]  %s3, 1024, %s50, [#allocation6], 64, 64, 4
    $region17: #{tpu_custom_call.1} parent=1 // pred_fallthru
      _
    // Predicated region
    $region18: #{tpu_custom_call.1} parent=1 // pred_check
      _
    $region19: #{tpu_custom_call.1} parent=1 // pred_check_branch
      %57 = sbr.rel (0) target = $region21
    $region20: #{tpu_custom_call.1} parent=1 // pred_region
      _
    $region21: #{tpu_custom_call.1} parent=1 // pred_fallthru
      _
    // Predicated region
    $region22: #{tpu_custom_call.1} parent=1 // pred_check
      _
    $region23: #{tpu_custom_call.1} parent=1 // pred_check_branch
      %59 = sbr.rel (0) target = $region25
    $region24: #{tpu_custom_call.1} parent=1 // pred_region
      %s61 = ssub.s32 1024, 1024
      %62 = vsyncadd [#allocation9], %s61
      %s63 = sshll.u32 [#allocation8], 4
      %s64 = int_to_ptr.vmem [resolvable:$true] %s63
      %69 = dma.hbm_to_vmem [thread:$0]  %s5, 1024, %s64, [#allocation9], 64, 64, 4
    $region25: #{tpu_custom_call.1} parent=1 // pred_fallthru
      _
    // Predicated region
    $region26: #{tpu_custom_call.1} parent=1 // pred_check
      _
    $region27: #{tpu_custom_call.1} parent=1 // pred_check_branch
      %71 = sbr.rel (0) target = $region29
    $region28: #{tpu_custom_call.1} parent=1 // pred_region
      _
    $region29: #{tpu_custom_call.1} parent=1 // pred_fallthru
      _
    // Predicated region
    $region30: #{tpu_custom_call.1} parent=1 // pred_check
      _
    $region31: #{tpu_custom_call.1} parent=1 // pred_check_branch
      %73 = sbr.rel (0) target = $region33
    $region32: #{tpu_custom_call.1} parent=1 // pred_region
      _
    $region33: #{tpu_custom_call.1} parent=1 // pred_fallthru
      _
    // Predicated region
    $region34: #{tpu_custom_call.1} parent=1 // pred_check
      _
    $region35: #{tpu_custom_call.1} parent=1 // pred_check_branch
      %75 = sbr.rel (0) target = $region37
    $region36: #{tpu_custom_call.1} parent=1 // pred_region
      _
    $region37: #{tpu_custom_call.1} parent=1 // pred_fallthru
      _
    // Predicated region
    $region38: #{tpu_custom_call.1} parent=1 // pred_check
      _
    $region39: #{tpu_custom_call.1} parent=1 // pred_check_branch
      %77 = sbr.rel (0) target = $region41
    $region40: #{tpu_custom_call.1} parent=1 // pred_region
      %78 = dma.done [#allocation3], 128
    $region41: #{tpu_custom_call.1} parent=1 // pred_fallthru
      _
    // Predicated region
    $region42: #{tpu_custom_call.1} parent=1 // pred_check
      _
    $region43: #{tpu_custom_call.1} parent=1 // pred_check_branch
      %80 = sbr.rel (0) target = $region45
    $region44: #{tpu_custom_call.1} parent=1 // pred_region
      %81 = dma.done [#allocation6], 2048
    $region45: #{tpu_custom_call.1} parent=1 // pred_fallthru
      _
    // Predicated region
    $region46: #{tpu_custom_call.1} parent=1 // pred_check
      _
    $region47: #{tpu_custom_call.1} parent=1 // pred_check_branch
      %83 = sbr.rel (0) target = $region49
    $region48: #{tpu_custom_call.1} parent=1 // pred_region
      %84 = dma.done [#allocation6], 1024
    $region49: #{tpu_custom_call.1} parent=1 // pred_fallthru
      _
    // Predicated region
    $region50: #{tpu_custom_call.1} parent=1 // pred_check
      _
    $region51: #{tpu_custom_call.1} parent=1 // pred_check_branch
      %86 = sbr.rel (0) target = $region53
    $region52: #{tpu_custom_call.1} parent=1 // pred_region
      %87 = dma.done [#allocation9], 1024
    $region53: #{tpu_custom_call.1} parent=1 // pred_fallthru
      _
    %v89 = vld [vmem:[#allocation2] sm:$0xf]
    %v90 = vld [vmem:[#allocation2 + $0x4] sm:$0xf]
    %v91 = vld [vmem:[#allocation5] sm:$0xff]
    %v92 = vld [vmem:[#allocation5 + $0x8] sm:$0xff]
    %v93 = vld [vmem:[#allocation5 + $0x10] sm:$0xff]
    %v94 = vld [vmem:[#allocation5 + $0x18] sm:$0xff]
    %v95 = vld [vmem:[#allocation5 + $0x20] sm:$0xff]
    %v96 = vld [vmem:[#allocation5 + $0x28] sm:$0xff]
    %v97 = vld [vmem:[#allocation5 + $0x30] sm:$0xff]
    %v98 = vld [vmem:[#allocation5 + $0x38] sm:$0xff]
    %v99 = vld [vmem:[#allocation5 + $0x40] sm:$0xff]
    %v100 = vld [vmem:[#allocation5 + $0x48] sm:$0xff]
    %v101 = vld [vmem:[#allocation5 + $0x50] sm:$0xff]
    %v102 = vld [vmem:[#allocation5 + $0x58] sm:$0xff]
    %v103 = vld [vmem:[#allocation5 + $0x60] sm:$0xff]
    %v104 = vld [vmem:[#allocation5 + $0x68] sm:$0xff]
    %v105 = vld [vmem:[#allocation5 + $0x70] sm:$0xff]
    %v106 = vld [vmem:[#allocation5 + $0x78] sm:$0xff]
    %v107 = vld [vmem:[%s2] sm:$0x3]
    %v109 = vlaneseq
    %v110 = vshrl.u32 %v109, 7
    %v111 = vsub.s32 0, %v110
    %v112 = vrot.slane %v107, %v111
    %v113 = vlaneseq
    %v114 = vshrl.u32 %v113, 7
    %v115 = vsub.s32 1, %v114
    %v116 = vrot.slane %v107, %v115
    %v121 = vunpack.c.l.b16 %v89
    %v122 = vunpack.c.l.b16 %v90
    %v123 = vpack.c.b16 %v122, %v121
    %v141 = vunpack.c.l.b16 %v91
    %v142 = vunpack.c.h.b16 %v91
    %v143 = vunpack.c.l.b16 %v92
    %v144 = vunpack.c.h.b16 %v92
    %v145 = vunpack.c.l.b16 %v93
    %v146 = vunpack.c.h.b16 %v93
    %v147 = vunpack.c.l.b16 %v94
    %v148 = vunpack.c.h.b16 %v94
    %v149 = vunpack.c.l.b16 %v95
    %v150 = vunpack.c.h.b16 %v95
    %v151 = vunpack.c.l.b16 %v96
    %v152 = vunpack.c.h.b16 %v96
    %v153 = vunpack.c.l.b16 %v97
    %v154 = vunpack.c.h.b16 %v97
    %v155 = vunpack.c.l.b16 %v98
    %v156 = vunpack.c.h.b16 %v98
    %v157 = vunpack.c.l.b16 %v99
    %v158 = vunpack.c.h.b16 %v99
    %v159 = vunpack.c.l.b16 %v100
    %v160 = vunpack.c.h.b16 %v100
    %v161 = vunpack.c.l.b16 %v101
    %v162 = vunpack.c.h.b16 %v101
    %v163 = vunpack.c.l.b16 %v102
    %v164 = vunpack.c.h.b16 %v102
    %v165 = vunpack.c.l.b16 %v103
    %v166 = vunpack.c.h.b16 %v103
    %v167 = vunpack.c.l.b16 %v104
    %v168 = vunpack.c.h.b16 %v104
    %v169 = vunpack.c.l.b16 %v105
    %v170 = vunpack.c.h.b16 %v105
    %v171 = vunpack.c.l.b16 %v106
    %v172 = vunpack.c.h.b16 %v106
    %v173 = vpack.c.b16 %v143, %v141
    %v174 = vpack.c.b16 %v144, %v142
    %v175 = vpack.c.b16 %v147, %v145
    %v176 = vpack.c.b16 %v148, %v146
    %v177 = vpack.c.b16 %v151, %v149
    %v178 = vpack.c.b16 %v152, %v150
    %v179 = vpack.c.b16 %v155, %v153
    %v180 = vpack.c.b16 %v156, %v154
    %v181 = vpack.c.b16 %v159, %v157
    %v182 = vpack.c.b16 %v160, %v158
    %v183 = vpack.c.b16 %v163, %v161
    %v184 = vpack.c.b16 %v164, %v162
    %v185 = vpack.c.b16 %v167, %v165
    %v186 = vpack.c.b16 %v168, %v166
    %v187 = vpack.c.b16 %v171, %v169
    %v188 = vpack.c.b16 %v172, %v170
    %205 = vmatprep.subr.bf16.mxu0 %v174
    %206 = vmatpush1.bf16.msra.mxu0 %v173
    %207 = vmatprep.subr.bf16.mxu0 %v176
    %208 = vmatpush1.bf16.msra.mxu0 %v175
    %209 = vmatprep.subr.bf16.mxu0 %v178
    %210 = vmatpush1.bf16.msra.mxu0 %v177
    %211 = vmatprep.subr.bf16.mxu0 %v180
    %212 = vmatpush1.bf16.msra.mxu0 %v179
    %213 = vmatprep.subr.bf16.mxu0 %v182
    %214 = vmatpush1.bf16.msra.mxu0 %v181
    %215 = vmatprep.subr.bf16.mxu0 %v184
    %216 = vmatpush1.bf16.msra.mxu0 %v183
    %217 = vmatprep.subr.bf16.mxu0 %v186
    %218 = vmatpush1.bf16.msra.mxu0 %v185
    %219 = vmatprep.subr.bf16.mxu0 %v188
    %220 = vmatpush1.bf16.msra.mxu0 %v187
    %221 = vmatprep.subr.bf16.mxu0 0
    %222 = vmatpush1.bf16.msra.mxu0 0
    %223 = vmatprep.subr.bf16.mxu0 0
    %224 = vmatpush1.bf16.msra.mxu0 0
    %225 = vmatprep.subr.bf16.mxu0 0
    %226 = vmatpush1.bf16.msra.mxu0 0
    %227 = vmatprep.subr.bf16.mxu0 0
    %228 = vmatpush1.bf16.msra.mxu0 0
    %229 = vmatprep.subr.bf16.mxu0 0
    %230 = vmatpush1.bf16.msra.mxu0 0
    %231 = vmatprep.subr.bf16.mxu0 0
    %232 = vmatpush1.bf16.msra.mxu0 0
    %233 = vmatprep.subr.bf16.mxu0 0
    %234 = vmatpush1.bf16.msra.mxu0 0
    %235 = vmatprep.subr.bf16.mxu0 0
    %236 = vmatpush1.bf16.msra.mxu0 0
    %237 = vmatprep.mubr.bf16.mxu0 0
    %238 = vmatmul.mubr.bf16.gmra.mrb[0].mxu0 %v123
    %v239 = vpop.f32.mrb[0].mxu0
    %v240 = vadd.f32 %v112, %v239
    %v241 = vpop.f32.mrb[0].mxu0
    %v242 = vadd.f32 %v116, %v241
    %v243 = vpop.f32.mrb[0].mxu0
    %v244 = vadd.f32 %v112, %v243
    %v245 = vpop.f32.mrb[0].mxu0
    %v246 = vadd.f32 %v116, %v245
    %247 = vdwg.mxu0
    %v248 = vmax.f32 %v240, 0.0
    %v249 = vmax.f32 %v242, 0.0
    %v250 = vmax.f32 %v244, 0.0
    %v251 = vmax.f32 %v246, 0.0
    %v252 = vpack.c.bf16 %v250, %v248
    %v253 = vpack.c.bf16 %v251, %v249
    %v254 = vld [vmem:[#allocation7] sm:$0xf]
    %v255 = vld [vmem:[#allocation7 + $0x4] sm:$0xf]
    %v256 = vld [vmem:[#allocation7 + $0x8] sm:$0xf]
    %v257 = vld [vmem:[#allocation7 + $0xc] sm:$0xf]
    %v258 = vld [vmem:[#allocation7 + $0x10] sm:$0xf]
    %v259 = vld [vmem:[#allocation7 + $0x14] sm:$0xf]
    %v260 = vld [vmem:[#allocation7 + $0x18] sm:$0xf]
    %v261 = vld [vmem:[#allocation7 + $0x1c] sm:$0xf]
    %v262 = vld [vmem:[#allocation7 + $0x20] sm:$0xf]
    %v263 = vld [vmem:[#allocation7 + $0x24] sm:$0xf]
    %v264 = vld [vmem:[#allocation7 + $0x28] sm:$0xf]
    %v265 = vld [vmem:[#allocation7 + $0x2c] sm:$0xf]
    %v266 = vld [vmem:[#allocation7 + $0x30] sm:$0xf]
    %v267 = vld [vmem:[#allocation7 + $0x34] sm:$0xf]
    %v268 = vld [vmem:[#allocation7 + $0x38] sm:$0xf]
    %v269 = vld [vmem:[#allocation7 + $0x3c] sm:$0xf]
    %v270 = vld [vmem:[%s4] sm:$0x1]
    %v272 = vlaneseq
    %v273 = vshrl.u32 %v272, 7
    %v274 = vsub.s32 0, %v273
    %v275 = vrot.slane %v270, %v274
    %v293 = vunpack.c.l.b16 %v254
    %v294 = vunpack.c.l.b16 %v255
    %v295 = vunpack.c.l.b16 %v256
    %v296 = vunpack.c.l.b16 %v257
    %v297 = vunpack.c.l.b16 %v258
    %v298 = vunpack.c.l.b16 %v259
    %v299 = vunpack.c.l.b16 %v260
    %v300 = vunpack.c.l.b16 %v261
    %v301 = vunpack.c.l.b16 %v262
    %v302 = vunpack.c.l.b16 %v263
    %v303 = vunpack.c.l.b16 %v264
    %v304 = vunpack.c.l.b16 %v265
    %v305 = vunpack.c.l.b16 %v266
    %v306 = vunpack.c.l.b16 %v267
    %v307 = vunpack.c.l.b16 %v268
    %v308 = vunpack.c.l.b16 %v269
    %v309 = vpack.c.b16 %v294, %v293
    %v310 = vpack.c.b16 %v296, %v295
    %v311 = vpack.c.b16 %v298, %v297
    %v312 = vpack.c.b16 %v300, %v299
    %v313 = vpack.c.b16 %v302, %v301
    %v314 = vpack.c.b16 %v304, %v303
    %v315 = vpack.c.b16 %v306, %v305
    %v316 = vpack.c.b16 %v308, %v307
    %325 = vmatprep.subr.bf16.mxu0 0
    %326 = vmatpush1.bf16.msra.mxu0 %v309
    %327 = vmatprep.subr.bf16.mxu0 0
    %328 = vmatpush1.bf16.msra.mxu0 %v310
    %329 = vmatprep.subr.bf16.mxu0 0
    %330 = vmatpush1.bf16.msra.mxu0 %v311
    %331 = vmatprep.subr.bf16.mxu0 0
    %332 = vmatpush1.bf16.msra.mxu0 %v312
    %333 = vmatprep.subr.bf16.mxu0 0
    %334 = vmatpush1.bf16.msra.mxu0 %v313
    %335 = vmatprep.subr.bf16.mxu0 0
    %336 = vmatpush1.bf16.msra.mxu0 %v314
    %337 = vmatprep.subr.bf16.mxu0 0
    %338 = vmatpush1.bf16.msra.mxu0 %v315
    %339 = vmatprep.subr.bf16.mxu0 0
    %340 = vmatpush1.bf16.msra.mxu0 %v316
    %341 = vmatprep.subr.bf16.mxu0 0
    %342 = vmatpush1.bf16.msra.mxu0 0
    %343 = vmatprep.subr.bf16.mxu0 0
    %344 = vmatpush1.bf16.msra.mxu0 0
    %345 = vmatprep.subr.bf16.mxu0 0
    %346 = vmatpush1.bf16.msra.mxu0 0
    %347 = vmatprep.subr.bf16.mxu0 0
    %348 = vmatpush1.bf16.msra.mxu0 0
    %349 = vmatprep.subr.bf16.mxu0 0
    %350 = vmatpush1.bf16.msra.mxu0 0
    %351 = vmatprep.subr.bf16.mxu0 0
    %352 = vmatpush1.bf16.msra.mxu0 0
    %353 = vmatprep.subr.bf16.mxu0 0
    %354 = vmatpush1.bf16.msra.mxu0 0
    %355 = vmatprep.subr.bf16.mxu0 0
    %356 = vmatpush1.bf16.msra.mxu0 0
    %357 = vmatprep.mubr.bf16.mxu0 0
    %358 = vmatmul.mubr.bf16.gmra.mrb[0].mxu0 %v253
    %v359 = vpop.f32.mrb[0].mxu0
    %v360 = vadd.f32 %v275, %v359
    %v361 = vpop.f32.mrb[0].mxu0
    %v362 = vpop.f32.mrb[0].mxu0
    %v363 = vadd.f32 %v275, %v362
    %v364 = vpop.f32.mrb[0].mxu0
    %365 = vdwg.mxu0
    %366 = vmax.xlane.f32.xlu0 %v360
    %v367 = vpop.xlane.xlu0 %366
    %368 = vmax.xlane.f32.xlu0 %v363
    %v369 = vpop.xlane.xlu0 %368
    %v370 = vsub.f32 %v360, %v367
    %v371 = vsub.f32 %v363, %v369
    %v372 = vmul.f32 %v370, 1.442695
    %v373 = vpow.pop %v372
    %v374 = vmul.f32 %v371, 1.442695
    %v375 = vpow.pop %v374
    %376 = vadd.xlane.f32.xlu0 %v373
    %v377 = vpop.xlane.xlu0 %376
    %378 = vadd.xlane.f32.xlu0 %v375
    %v379 = vpop.xlane.xlu0 %378
    %v380 = vrcp.pop %v377
    %v381 = vrcp.pop %v379
    %v382 = vmul.f32 %v373, %v380
    %v383 = vmul.f32 %v375, %v381
    %v384 = vld [vmem:[#allocation8] sm:$0xf]
    %v385 = vld [vmem:[#allocation8 + $0x4] sm:$0xf]
    %v386 = vld [vmem:[#allocation8 + $0x8] sm:$0xf]
    %v387 = vld [vmem:[#allocation8 + $0xc] sm:$0xf]
    %v388 = vld [vmem:[#allocation8 + $0x10] sm:$0xf]
    %v389 = vld [vmem:[#allocation8 + $0x14] sm:$0xf]
    %v390 = vld [vmem:[#allocation8 + $0x18] sm:$0xf]
    %v391 = vld [vmem:[#allocation8 + $0x1c] sm:$0xf]
    %v392 = vld [vmem:[#allocation8 + $0x20] sm:$0xf]
    %v393 = vld [vmem:[#allocation8 + $0x24] sm:$0xf]
    %v394 = vld [vmem:[#allocation8 + $0x28] sm:$0xf]
    %v395 = vld [vmem:[#allocation8 + $0x2c] sm:$0xf]
    %v396 = vld [vmem:[#allocation8 + $0x30] sm:$0xf]
    %v397 = vld [vmem:[#allocation8 + $0x34] sm:$0xf]
    %v398 = vld [vmem:[#allocation8 + $0x38] sm:$0xf]
    %v399 = vld [vmem:[#allocation8 + $0x3c] sm:$0xf]
    %v400 = vld [vmem:[%s6] sm:$0x1]
    %v402 = vlaneseq
    %v403 = vshrl.u32 %v402, 7
    %v404 = vsub.s32 0, %v403
    %v405 = vrot.slane %v400, %v404
    %v423 = vunpack.c.l.b16 %v384
    %v424 = vunpack.c.l.b16 %v385
    %v425 = vunpack.c.l.b16 %v386
    %v426 = vunpack.c.l.b16 %v387
    %v427 = vunpack.c.l.b16 %v388
    %v428 = vunpack.c.l.b16 %v389
    %v429 = vunpack.c.l.b16 %v390
    %v430 = vunpack.c.l.b16 %v391
    %v431 = vunpack.c.l.b16 %v392
    %v432 = vunpack.c.l.b16 %v393
    %v433 = vunpack.c.l.b16 %v394
    %v434 = vunpack.c.l.b16 %v395
    %v435 = vunpack.c.l.b16 %v396
    %v436 = vunpack.c.l.b16 %v397
    %v437 = vunpack.c.l.b16 %v398
    %v438 = vunpack.c.l.b16 %v399
    %v439 = vpack.c.b16 %v424, %v423
    %v440 = vpack.c.b16 %v426, %v425
    %v441 = vpack.c.b16 %v428, %v427
    %v442 = vpack.c.b16 %v430, %v429
    %v443 = vpack.c.b16 %v432, %v431
    %v444 = vpack.c.b16 %v434, %v433
    %v445 = vpack.c.b16 %v436, %v435
    %v446 = vpack.c.b16 %v438, %v437
    %455 = vmatprep.subr.bf16.mxu0 0
    %456 = vmatpush1.bf16.msra.mxu0 %v439
    %457 = vmatprep.subr.bf16.mxu0 0
    %458 = vmatpush1.bf16.msra.mxu0 %v440
    %459 = vmatprep.subr.bf16.mxu0 0
    %460 = vmatpush1.bf16.msra.mxu0 %v441
    %461 = vmatprep.subr.bf16.mxu0 0
    %462 = vmatpush1.bf16.msra.mxu0 %v442
    %463 = vmatprep.subr.bf16.mxu0 0
    %464 = vmatpush1.bf16.msra.mxu0 %v443
    %465 = vmatprep.subr.bf16.mxu0 0
    %466 = vmatpush1.bf16.msra.mxu0 %v444
    %467 = vmatprep.subr.bf16.mxu0 0
    %468 = vmatpush1.bf16.msra.mxu0 %v445
    %469 = vmatprep.subr.bf16.mxu0 0
    %470 = vmatpush1.bf16.msra.mxu0 %v446
    %471 = vmatprep.subr.bf16.mxu0 0
    %472 = vmatpush1.bf16.msra.mxu0 0
    %473 = vmatprep.subr.bf16.mxu0 0
    %474 = vmatpush1.bf16.msra.mxu0 0
    %475 = vmatprep.subr.bf16.mxu0 0
    %476 = vmatpush1.bf16.msra.mxu0 0
    %477 = vmatprep.subr.bf16.mxu0 0
    %478 = vmatpush1.bf16.msra.mxu0 0
    %479 = vmatprep.subr.bf16.mxu0 0
    %480 = vmatpush1.bf16.msra.mxu0 0
    %481 = vmatprep.subr.bf16.mxu0 0
    %482 = vmatpush1.bf16.msra.mxu0 0
    %483 = vmatprep.subr.bf16.mxu0 0
    %484 = vmatpush1.bf16.msra.mxu0 0
    %485 = vmatprep.subr.bf16.mxu0 0
    %486 = vmatpush1.bf16.msra.mxu0 0
    %487 = vmatprep.mubr.bf16.mxu0 0
    %488 = vmatmul.mubr.bf16.gmra.mrb[0].mxu0 %v252
    %v489 = vpop.f32.mrb[0].mxu0
    %v490 = vadd.f32 %v405, %v489
    %v491 = vpop.f32.mrb[0].mxu0
    %v492 = vpop.f32.mrb[0].mxu0
    %v493 = vadd.f32 %v405, %v492
    %v494 = vpop.f32.mrb[0].mxu0
    %495 = vdwg.mxu0
    %496 = vadd.xlane.f32.xlu0 %v490
    %v497 = vpop.xlane.xlu0 %496
    %498 = vadd.xlane.f32.xlu0 %v493
    %v499 = vpop.xlane.xlu0 %498
    %v500 = vmul.f32 %v497, 0.0625
    %v501 = vmul.f32 %v499, 0.0625
    %v502 = vsub.f32 %v490, %v500
    %v503 = vsub.f32 %v493, %v501
    %v504 = vmul.f32 %v502, %v502
    %v505 = vmul.f32 %v503, %v503
    %506 = vadd.xlane.f32.xlu0 %v504
    %v507 = vpop.xlane.xlu0 %506
    %508 = vadd.xlane.f32.xlu0 %v505
    %v509 = vpop.xlane.xlu0 %508
    %v510 = vmul.f32 %v507, 0.0625
    %v511 = vmul.f32 %v509, 0.0625
    %v512 = vmul.f32 %v500, 7.0
    %v513 = vmul.f32 %v501, 7.0
    %v514 = vmul.f32 %v512, %v500
    %v515 = vmul.f32 %v513, %v501
    %v516 = vsub.f32 %v510, %v514
    %v517 = vsub.f32 %v511, %v515
    %v518 = vadd.f32 %v516, 1e-05
    %v519 = vadd.f32 %v517, 1e-05
    %v520 = vrsqrt.pop %v518
    %v521 = vrsqrt.pop %v519
    %v522 = vmul.f32 %v502, %v520
    %v523 = vmul.f32 %v503, %v521
    %v524 = vld [vmem:[%s7] sm:$0x1]
    %v526 = vlaneseq
    %v527 = vshrl.u32 %v526, 7
    %v528 = vsub.s32 0, %v527
    %v529 = vrot.slane %v524, %v528
    %v531 = vmul.f32 %v522, %v529
    %v532 = vmul.f32 %v523, %v529
    %v533 = vld [vmem:[%s8] sm:$0x1]
    %v535 = vlaneseq
    %v536 = vshrl.u32 %v535, 7
    %v537 = vsub.s32 0, %v536
    %v538 = vrot.slane %v533, %v537
    %v540 = vadd.f32 %v531, %v538
    %v541 = vadd.f32 %v532, %v538
    %v542 = vmul.f32 %v540, %v382
    %v543 = vmul.f32 %v541, %v383
    %v544 = vpack.c.bf16 %v543, %v542
    %v546 = vunpack.c.l.b16 %v544
    %v547 = vunpack.c.h.b16 %v544
    %v548 = vpack.c.b16 %v546, %v546
    %v549 = vpack.c.b16 %v547, %v547
    %552 = vst [vmem:[#allocation10] sm:$0xf] %v548
    %553 = vst [vmem:[#allocation10 + $0x4] sm:$0xf] %v549
    // Predicated region
    $region54: #{tpu_custom_call.1} parent=1 // pred_check
      _
    $region55: #{tpu_custom_call.1} parent=1 // pred_check_branch
      %555 = sbr.rel (0) target = $region57
    $region56: #{tpu_custom_call.1} parent=1 // pred_region
      %s557 = ssub.s32 128, 128
      %558 = vsyncadd [#allocation4], %s557
      %s559 = sshll.u32 [#allocation10], 4
      %s560 = int_to_ptr.vmem [resolvable:$true] %s559
      %565 = dma.vmem_to_hbm [thread:$0]  %s560, 128, %s9, [#allocation4], 64, 64, 4
    $region57: #{tpu_custom_call.1} parent=1 // pred_fallthru
      _
    // Predicated region
    $region58: #{tpu_custom_call.1} parent=1 // pred_check
      _
    $region59: #{tpu_custom_call.1} parent=1 // pred_check_branch
      %567 = sbr.rel (0) target = $region61
    $region60: #{tpu_custom_call.1} parent=1 // pred_region
      %568 = dma.done [#allocation4], 128
    $region61: #{tpu_custom_call.1} parent=1 // pred_fallthru
      _
    %569 = vsyncpa [#allocation3], 1
    %570 = vsyncpa [#allocation6], 1
    %571 = vsyncpa [#allocation9], 1
    %572 = vsyncpa [#allocation4], 1

</llo_original>
